<compile_context>
chip_gen: v7x
topology: tpu7x:2x2x1
jax: 0.10.0
libtpu: 0.0.40
codegen_flags: <defaults>
</compile_context>

<pallas_src>
import functools

import numpy as np
import jax
import jax.numpy as jnp
from jax.experimental import pallas as pl
from jax.experimental.pallas import tpu as pltpu

K = 5    # kernel size of all three convs
C = 20   # output channels of every conv
CP = 24  # channels padded to a sublane multiple of 8


def _cdiv(a, b):
    return -(-a // b)


def _out_len(L, dilation, stride=2, k=K):
    # PyTorch Conv1d "valid" output length.
    return (L - dilation * (k - 1) - 1) // stride + 1


def input_frames_kernel(x8_ref, w1_ref, b1_ref, w2_ref, b2_ref, w3_ref, b3_ref,
                        o_ref, *, bt, n1, n2, n3):
    """One batch tile (bt items) per grid step; lane axis is (time, batch).

    x8_ref : (8, lq*bt)    x8[r, c*bt + b] = x[b, 8c + r]   (phase-deinterleaved)
    w1_ref : (K, CP, 1)    layer-1 weights, channel rows C..CP-1 zero
    b1_ref : (CP, 1)
    w2_ref : (CP, K*CP)    tap-flattened layer-2 weights (padded slots zero)
    b2_ref : (CP, 1)
    w3_ref : (CP, K*CP)    tap-flattened layer-3 weights (padded slots zero)
    b3_ref : (CP, 1)
    o_ref  : (CP, n3*bt)   o[ch, m*bt + b] = y[b, ch, m]
    """
    c1 = n1 * bt
    c2 = n2 * bt
    c3 = n3 * bt
    b1 = b1_ref[...]

    # ---- Layer 1 (Cin=1): VPU broadcast FMAs over the 8 input phases,
    # evaluated only at the positions the later layers consume:
    #   h1ee[:, u*bt+b] = h1[b, :, 4u]     (x[b, 8u + k],     k = 0..4)
    #   h1eo[:, u*bt+b] = h1[b, :, 4u+2]   (x[b, 8u + 4 + k], k = 0..4)
    xr = [x8_ref[r:r + 1, 0:c1] for r in range(8)]      # load each row once
    x0s = x8_ref[0:1, bt:bt + c1]                        # row 0 shifted by one
    acc_ee = w1_ref[0] * xr[0]
    for k in range(1, K):
        acc_ee = acc_ee + w1_ref[k] * xr[k]
    acc_eo = w1_ref[0] * xr[4]                           # row 4 reused (ee/eo)
    for k in range(1, K - 1):
        acc_eo = acc_eo + w1_ref[k] * xr[4 + k]
    acc_eo = acc_eo + w1_ref[K - 1] * x0s
    h1ee = jnp.maximum(acc_ee + b1, 0.0)                 # (CP, c1)
    h1eo = jnp.maximum(acc_eo + b1, 0.0)                 # (CP, c1)

    # ---- Layer 2: h2e[:, p*bt+b] = relu(b2 + sum_k W2[k] @ h1[b, :, 4p+2k]).
    # Stack the 5 taps along sublanes (24-row, 8-aligned chunks) and do ONE
    # depth-120 MXU dot with N = bt*n2 lanes.
    s2 = jnp.concatenate(
        [h1ee[:, 0:c2],
         h1eo[:, 0:c2],
         h1ee[:, bt:bt + c2],
         h1eo[:, bt:bt + c2],
         h1ee[:, 2 * bt:2 * bt + c2]], axis=0)           # (K*CP, c2)
    h2e = jnp.maximum(
        b2_ref[...] + jnp.dot(w2_ref[...], s2,
                              preferred_element_type=jnp.float32), 0.0)

    # ---- Layer 3: y[:, m*bt+b] = relu(b3 + sum_k W3[k] @ h2e[b, :, m+2k]).
    s3 = jnp.concatenate(
        [h2e[:, 2 * g * bt:2 * g * bt + c3] for g in range(K)], axis=0)
    o_ref[...] = jnp.maximum(
        b3_ref[...] + jnp.dot(w3_ref[...], s3,
                              preferred_element_type=jnp.float32), 0.0)


def input_frames(x, params):
    (w1, b1), (w2, b2), (w3, b3) = params
    B, cin, L = x.shape
    assert cin == 1
    L1 = _out_len(L, 1)
    L2 = _out_len(L1, 2)
    L3 = _out_len(L2, 4)
    assert L3 >= 1, "input too short for the three convolutions"

    n3 = L3          # final output columns
    n2 = L3 + 8      # even-indexed h2 columns needed
    n1 = n2 + 2      # stride-4 h1 columns needed (both phases)
    lq = n1 + 1      # columns of the 8-phase deinterleaved input

    # --- batch tile: pack enough items per grid step so the MXU N dim and the
    # output lane dim reach ~256, but keep >=2 grid steps (both v7x TCs) when
    # that does not drop the lane dim below 128.
    bt = min(B, max(1, _cdiv(256, n3)))
    if B > 1 and _cdiv(B, bt) < 2:
        bt_half = _cdiv(B, 2)
        if bt_half * n3 >= 128:
            bt = bt_half
    steps = _cdiv(B, bt)
    Bp = steps * bt

    # ---------- wrapper-side layout plumbing (free relative to kernel) ------
    # 8-phase deinterleave + time-major/batch-minor lane packing:
    #   x8[s, r, c*bt + b] = x[s*bt + b, 8c + r]
    need = 8 * lq
    xp = x[:, 0, :]
    xp = jnp.pad(xp, ((0, 0), (0, need - L))) if need > L else xp[:, :need]
    if Bp > B:
        xp = jnp.pad(xp, ((0, Bp - B), (0, 0)))
    x8 = (xp.reshape(steps, bt, lq, 8)
            .transpose(0, 3, 2, 1)
            .reshape(steps, 8, lq * bt))

    # Layer-1 weights: (C,1,K) -> (K, CP, 1), channel rows padded with zeros.
    w1p = jnp.pad(w1[:, 0, :], ((0, CP - C), (0, 0)))      # (CP, K)
    w1k = w1p.T[:, :, None]                                # (K, CP, 1)
    b1p = jnp.pad(b1, (0, CP - C))[:, None]                # (CP, 1)

    # Layers 2/3: flatten K taps into the contraction dim,
    # Wflat[:, g*CP + c] = W[:, c, g], zero in padded channel slots.
    def flatten_w(w):
        wp = jnp.pad(w, ((0, CP - C), (0, CP - C), (0, 0)))
        return wp.transpose(0, 2, 1).reshape(CP, K * CP)

    w2f = flatten_w(w2)                                    # (CP, K*CP)
    b2p = jnp.pad(b2, (0, CP - C))[:, None]
    w3f = flatten_w(w3)                                    # (CP, K*CP)
    b3p = jnp.pad(b3, (0, CP - C))[:, None]

    # Explicit VMEM budget (double-buffered blocks + live intermediates),
    # clamped to the chip's capacity minus headroom (v7x: 64 MiB per TC).
    def _pad_up(v, m):
        return -(-v // m) * m

    lane = 128
    c1 = _pad_up(n1 * bt, lane)
    c2 = _pad_up(n2 * bt, lane)
    c3 = _pad_up(n3 * bt, lane)
    cx = _pad_up(lq * bt, lane)
    blk_bytes = 4 * (8 * cx + CP * c3)                     # in + out block
    live_bytes = 4 * (2 * CP * c1                          # h1ee / h1eo
                      + (K * CP + CP) * c2                 # s2 slab + h2e
                      + K * CP * c3)                       # s3 slab
    fixed_bytes = 4 * (K * CP * lane + 3 * CP * lane
                       + 2 * CP * _pad_up(K * CP, lane))   # weights / biases
    try:
        cap = int(pltpu.get_tpu_info().vmem_capacity_bytes)
    except Exception:
        cap = 64 << 20                                     # v7x-safe floor
    vmem_limit = int(min(cap - (8 << 20),
                         max(32 << 20,
                             3 * (2 * blk_bytes + live_bytes) + fixed_bytes)))

    # Advisory cost estimate so XLA schedules this call sensibly.
    flops = 2 * steps * bt * (CP * (K * CP) * (n2 + n3)    # two MXU dots
                              + 2 * K * CP * n1)           # layer-1 FMAs
    bytes_accessed = 4 * (x8.size + steps * CP * n3 * bt
                          + w1k.size + w2f.size + w3f.size + 3 * CP)
    cost = pl.CostEstimate(flops=flops, transcendentals=0,
                           bytes_accessed=bytes_accessed)

    kernel = functools.partial(input_frames_kernel, bt=bt, n1=n1, n2=n2, n3=n3)

    out = pl.pallas_call(
        kernel,
        out_shape=jax.ShapeDtypeStruct((steps, CP, n3 * bt), jnp.float32),
        grid=(steps,),
        in_specs=[
            pl.BlockSpec((None, 8, lq * bt), lambda s: (s, 0, 0)),
            pl.BlockSpec((K, CP, 1), lambda s: (0, 0, 0)),
            pl.BlockSpec((CP, 1), lambda s: (0, 0)),
            pl.BlockSpec((CP, K * CP), lambda s: (0, 0)),
            pl.BlockSpec((CP, 1), lambda s: (0, 0)),
            pl.BlockSpec((CP, K * CP), lambda s: (0, 0)),
            pl.BlockSpec((CP, 1), lambda s: (0, 0)),
        ],
        out_specs=pl.BlockSpec((None, CP, n3 * bt), lambda s: (s, 0, 0)),
        compiler_params=pltpu.CompilerParams(
            dimension_semantics=("parallel",),
            vmem_limit_bytes=vmem_limit),
        cost_estimate=cost,
    )(x8, w1k, b1p, w2f, b2p, w3f, b3p)

    # Un-pack (steps, CP, n3*bt) -> (B, C, L3).
    out = (out.reshape(steps, CP, n3, bt)
              .transpose(0, 3, 1, 2)
              .reshape(Bp, CP, n3))
    return out[:B, :C, :]


def init_params(key):
    """PyTorch Conv1d default init (uniform +/- 1/sqrt(fan_in))."""
    def conv_init(k, cout, cin, ks):
        kw, kb = jax.random.split(k)
        bound = 1.0 / np.sqrt(cin * ks)
        w = jax.random.uniform(kw, (cout, cin, ks), jnp.float32, -bound, bound)
        b = jax.random.uniform(kb, (cout,), jnp.float32, -bound, bound)
        return w, b

    k1, k2, k3 = jax.random.split(key, 3)
    return (conv_init(k1, 20, 1, K),
            conv_init(k2, 20, 20, K),
            conv_init(k3, 20, 20, K))


def ref_forward(x, params):
    """Pure-JAX reference of the PyTorch forward (for validation)."""
    h = x
    for (w, b), d in zip(params, (1, 2, 4)):
        h = jax.lax.conv_general_dilated(
            h, w, window_strides=(2,), padding="VALID", rhs_dilation=(d,),
            dimension_numbers=("NCH", "OIH", "NCH"))
        h = jax.nn.relu(h + b[None, :, None])
    return h


if __name__ == "__main__":
    key = jax.random.PRNGKey(0)
    pkey, xkey = jax.random.split(key)
    params = init_params(pkey)

    # (B, L) cases: small (L3=6,15) plus one that exercises multi-step grid
    # and batch padding (B=9, L=400 -> L3=40, bt=7, 2 grid steps).
    for Bsz, L in ((2, 128), (2, 200), (9, 400)):
        x = jax.random.normal(jax.random.fold_in(xkey, 1000 * Bsz + L),
                              (Bsz, 1, L), jnp.float32)
        out = jax.block_until_ready(input_frames(x, params))
        ref = ref_forward(x, params)
        np.testing.assert_allclose(np.asarray(out), np.asarray(ref),
                                   rtol=1e-4, atol=1e-4)
        L3 = _out_len(_out_len(_out_len(L, 1), 2), 4)
        assert out.shape == (Bsz, 20, L3)
    print("KERNEL_OK")
</pallas_src>

<mosaic_0001>
module attributes {stable_mosaic.version = 11 : i64} {
  func.func @input_frames_kernel(%arg0: i32, %arg1: memref<1x8x34xf32, #tpu.memory_space<vmem>>, %arg2: memref<5x24x1xf32, #tpu.memory_space<vmem>>, %arg3: memref<24x1xf32, #tpu.memory_space<vmem>>, %arg4: memref<24x120xf32, #tpu.memory_space<vmem>>, %arg5: memref<24x1xf32, #tpu.memory_space<vmem>>, %arg6: memref<24x120xf32, #tpu.memory_space<vmem>>, %arg7: memref<24x1xf32, #tpu.memory_space<vmem>>, %arg8: memref<1x24x12xf32, #tpu.memory_space<vmem>>) attributes {dimension_semantics = [#tpu.dimension_semantics<parallel>], iteration_bounds = array<i64: 1>, scalar_prefetch = 0 : i64, scratch_operands = 0 : i64, tpu.core_type = #tpu.core_type<tc>, window_params = [{transform_indices = @transform_0, window_bounds = array<i64: 1, 8, 34>}, {pipeline_mode = #tpu.pipeline_mode<synchronous>, transform_indices = @transform_1, window_bounds = array<i64: 5, 24, 1>}, {pipeline_mode = #tpu.pipeline_mode<synchronous>, transform_indices = @transform_2, window_bounds = array<i64: 24, 1>}, {pipeline_mode = #tpu.pipeline_mode<synchronous>, transform_indices = @transform_3, window_bounds = array<i64: 24, 120>}, {pipeline_mode = #tpu.pipeline_mode<synchronous>, transform_indices = @transform_4, window_bounds = array<i64: 24, 1>}, {pipeline_mode = #tpu.pipeline_mode<synchronous>, transform_indices = @transform_5, window_bounds = array<i64: 24, 120>}, {pipeline_mode = #tpu.pipeline_mode<synchronous>, transform_indices = @transform_6, window_bounds = array<i64: 24, 1>}, {transform_indices = @transform_7, window_bounds = array<i64: 1, 24, 12>}]} {
    %c0 = arith.constant 0 : index
    %c0_0 = arith.constant 0 : index
    %0 = vector.load %arg3[%c0, %c0_0] : memref<24x1xf32, #tpu.memory_space<vmem>>, vector<24x1xf32>
    %c0_1 = arith.constant 0 : index
    %c0_2 = arith.constant 0 : index
    %c0_3 = arith.constant 0 : index
    %1 = vector.load %arg1[%c0_1, %c0_2, %c0_3] : memref<1x8x34xf32, #tpu.memory_space<vmem>>, vector<1x1x32xf32>
    %2 = vector.shape_cast %1 : vector<1x1x32xf32> to vector<1x32xf32>
    %c0_4 = arith.constant 0 : index
    %c1 = arith.constant 1 : index
    %c0_5 = arith.constant 0 : index
    %3 = vector.load %arg1[%c0_4, %c1, %c0_5] : memref<1x8x34xf32, #tpu.memory_space<vmem>>, vector<1x1x32xf32>
    %4 = vector.shape_cast %3 : vector<1x1x32xf32> to vector<1x32xf32>
    %c0_6 = arith.constant 0 : index
    %c2 = arith.constant 2 : index
    %c0_7 = arith.constant 0 : index
    %5 = vector.load %arg1[%c0_6, %c2, %c0_7] : memref<1x8x34xf32, #tpu.memory_space<vmem>>, vector<1x1x32xf32>
    %6 = vector.shape_cast %5 : vector<1x1x32xf32> to vector<1x32xf32>
    %c0_8 = arith.constant 0 : index
    %c3 = arith.constant 3 : index
    %c0_9 = arith.constant 0 : index
    %7 = vector.load %arg1[%c0_8, %c3, %c0_9] : memref<1x8x34xf32, #tpu.memory_space<vmem>>, vector<1x1x32xf32>
    %8 = vector.shape_cast %7 : vector<1x1x32xf32> to vector<1x32xf32>
    %c0_10 = arith.constant 0 : index
    %c4 = arith.constant 4 : index
    %c0_11 = arith.constant 0 : index
    %9 = vector.load %arg1[%c0_10, %c4, %c0_11] : memref<1x8x34xf32, #tpu.memory_space<vmem>>, vector<1x1x32xf32>
    %10 = vector.shape_cast %9 : vector<1x1x32xf32> to vector<1x32xf32>
    %c0_12 = arith.constant 0 : index
    %c5 = arith.constant 5 : index
    %c0_13 = arith.constant 0 : index
    %11 = vector.load %arg1[%c0_12, %c5, %c0_13] : memref<1x8x34xf32, #tpu.memory_space<vmem>>, vector<1x1x32xf32>
    %12 = vector.shape_cast %11 : vector<1x1x32xf32> to vector<1x32xf32>
    %c0_14 = arith.constant 0 : index
    %c6 = arith.constant 6 : index
    %c0_15 = arith.constant 0 : index
    %13 = vector.load %arg1[%c0_14, %c6, %c0_15] : memref<1x8x34xf32, #tpu.memory_space<vmem>>, vector<1x1x32xf32>
    %14 = vector.shape_cast %13 : vector<1x1x32xf32> to vector<1x32xf32>
    %c0_16 = arith.constant 0 : index
    %c7 = arith.constant 7 : index
    %c0_17 = arith.constant 0 : index
    %15 = vector.load %arg1[%c0_16, %c7, %c0_17] : memref<1x8x34xf32, #tpu.memory_space<vmem>>, vector<1x1x32xf32>
    %16 = vector.shape_cast %15 : vector<1x1x32xf32> to vector<1x32xf32>
    %c0_18 = arith.constant 0 : index
    %c0_19 = arith.constant 0 : index
    %c2_20 = arith.constant 2 : index
    %17 = vector.load %arg1[%c0_18, %c0_19, %c2_20] : memref<1x8x34xf32, #tpu.memory_space<vmem>>, vector<1x1x32xf32>
    %18 = vector.shape_cast %17 : vector<1x1x32xf32> to vector<1x32xf32>
    %c0_21 = arith.constant 0 : index
    %c0_22 = arith.constant 0 : index
    %c0_23 = arith.constant 0 : index
    %19 = vector.load %arg2[%c0_21, %c0_22, %c0_23] : memref<5x24x1xf32, #tpu.memory_space<vmem>>, vector<1x24x1xf32>
    %20 = vector.shape_cast %19 : vector<1x24x1xf32> to vector<24x1xf32>
    %21 = vector.broadcast %20 : vector<24x1xf32> to vector<24x32xf32>
    %22 = vector.broadcast %2 : vector<1x32xf32> to vector<24x32xf32>
    %23 = arith.mulf %21, %22 : vector<24x32xf32>
    %c1_24 = arith.constant 1 : index
    %c0_25 = arith.constant 0 : index
    %c0_26 = arith.constant 0 : index
    %24 = vector.load %arg2[%c1_24, %c0_25, %c0_26] : memref<5x24x1xf32, #tpu.memory_space<vmem>>, vector<1x24x1xf32>
    %25 = vector.shape_cast %24 : vector<1x24x1xf32> to vector<24x1xf32>
    %26 = vector.broadcast %25 : vector<24x1xf32> to vector<24x32xf32>
    %27 = vector.broadcast %4 : vector<1x32xf32> to vector<24x32xf32>
    %28 = arith.mulf %26, %27 : vector<24x32xf32>
    %29 = arith.addf %23, %28 : vector<24x32xf32>
    %c2_27 = arith.constant 2 : index
    %c0_28 = arith.constant 0 : index
    %c0_29 = arith.constant 0 : index
    %30 = vector.load %arg2[%c2_27, %c0_28, %c0_29] : memref<5x24x1xf32, #tpu.memory_space<vmem>>, vector<1x24x1xf32>
    %31 = vector.shape_cast %30 : vector<1x24x1xf32> to vector<24x1xf32>
    %32 = vector.broadcast %31 : vector<24x1xf32> to vector<24x32xf32>
    %33 = vector.broadcast %6 : vector<1x32xf32> to vector<24x32xf32>
    %34 = arith.mulf %32, %33 : vector<24x32xf32>
    %35 = arith.addf %29, %34 : vector<24x32xf32>
    %c3_30 = arith.constant 3 : index
    %c0_31 = arith.constant 0 : index
    %c0_32 = arith.constant 0 : index
    %36 = vector.load %arg2[%c3_30, %c0_31, %c0_32] : memref<5x24x1xf32, #tpu.memory_space<vmem>>, vector<1x24x1xf32>
    %37 = vector.shape_cast %36 : vector<1x24x1xf32> to vector<24x1xf32>
    %38 = vector.broadcast %37 : vector<24x1xf32> to vector<24x32xf32>
    %39 = vector.broadcast %8 : vector<1x32xf32> to vector<24x32xf32>
    %40 = arith.mulf %38, %39 : vector<24x32xf32>
    %41 = arith.addf %35, %40 : vector<24x32xf32>
    %c4_33 = arith.constant 4 : index
    %c0_34 = arith.constant 0 : index
    %c0_35 = arith.constant 0 : index
    %42 = vector.load %arg2[%c4_33, %c0_34, %c0_35] : memref<5x24x1xf32, #tpu.memory_space<vmem>>, vector<1x24x1xf32>
    %43 = vector.shape_cast %42 : vector<1x24x1xf32> to vector<24x1xf32>
    %44 = vector.broadcast %43 : vector<24x1xf32> to vector<24x32xf32>
    %45 = vector.broadcast %10 : vector<1x32xf32> to vector<24x32xf32>
    %46 = arith.mulf %44, %45 : vector<24x32xf32>
    %47 = arith.addf %41, %46 : vector<24x32xf32>
    %c0_36 = arith.constant 0 : index
    %c0_37 = arith.constant 0 : index
    %c0_38 = arith.constant 0 : index
    %48 = vector.load %arg2[%c0_36, %c0_37, %c0_38] : memref<5x24x1xf32, #tpu.memory_space<vmem>>, vector<1x24x1xf32>
    %49 = vector.shape_cast %48 : vector<1x24x1xf32> to vector<24x1xf32>
    %50 = vector.broadcast %49 : vector<24x1xf32> to vector<24x32xf32>
    %51 = vector.broadcast %10 : vector<1x32xf32> to vector<24x32xf32>
    %52 = arith.mulf %50, %51 : vector<24x32xf32>
    %c1_39 = arith.constant 1 : index
    %c0_40 = arith.constant 0 : index
    %c0_41 = arith.constant 0 : index
    %53 = vector.load %arg2[%c1_39, %c0_40, %c0_41] : memref<5x24x1xf32, #tpu.memory_space<vmem>>, vector<1x24x1xf32>
    %54 = vector.shape_cast %53 : vector<1x24x1xf32> to vector<24x1xf32>
    %55 = vector.broadcast %54 : vector<24x1xf32> to vector<24x32xf32>
    %56 = vector.broadcast %12 : vector<1x32xf32> to vector<24x32xf32>
    %57 = arith.mulf %55, %56 : vector<24x32xf32>
    %58 = arith.addf %52, %57 : vector<24x32xf32>
    %c2_42 = arith.constant 2 : index
    %c0_43 = arith.constant 0 : index
    %c0_44 = arith.constant 0 : index
    %59 = vector.load %arg2[%c2_42, %c0_43, %c0_44] : memref<5x24x1xf32, #tpu.memory_space<vmem>>, vector<1x24x1xf32>
    %60 = vector.shape_cast %59 : vector<1x24x1xf32> to vector<24x1xf32>
    %61 = vector.broadcast %60 : vector<24x1xf32> to vector<24x32xf32>
    %62 = vector.broadcast %14 : vector<1x32xf32> to vector<24x32xf32>
    %63 = arith.mulf %61, %62 : vector<24x32xf32>
    %64 = arith.addf %58, %63 : vector<24x32xf32>
    %c3_45 = arith.constant 3 : index
    %c0_46 = arith.constant 0 : index
    %c0_47 = arith.constant 0 : index
    %65 = vector.load %arg2[%c3_45, %c0_46, %c0_47] : memref<5x24x1xf32, #tpu.memory_space<vmem>>, vector<1x24x1xf32>
    %66 = vector.shape_cast %65 : vector<1x24x1xf32> to vector<24x1xf32>
    %67 = vector.broadcast %66 : vector<24x1xf32> to vector<24x32xf32>
    %68 = vector.broadcast %16 : vector<1x32xf32> to vector<24x32xf32>
    %69 = arith.mulf %67, %68 : vector<24x32xf32>
    %70 = arith.addf %64, %69 : vector<24x32xf32>
    %c4_48 = arith.constant 4 : index
    %c0_49 = arith.constant 0 : index
    %c0_50 = arith.constant 0 : index
    %71 = vector.load %arg2[%c4_48, %c0_49, %c0_50] : memref<5x24x1xf32, #tpu.memory_space<vmem>>, vector<1x24x1xf32>
    %72 = vector.shape_cast %71 : vector<1x24x1xf32> to vector<24x1xf32>
    %73 = vector.broadcast %72 : vector<24x1xf32> to vector<24x32xf32>
    %74 = vector.broadcast %18 : vector<1x32xf32> to vector<24x32xf32>
    %75 = arith.mulf %73, %74 : vector<24x32xf32>
    %76 = arith.addf %70, %75 : vector<24x32xf32>
    %77 = vector.broadcast %0 : vector<24x1xf32> to vector<24x32xf32>
    %78 = arith.addf %47, %77 : vector<24x32xf32>
    %cst = arith.constant 0.000000e+00 : f32
    %79 = vector.broadcast %cst : f32 to vector<24x32xf32>
    %80 = arith.maximumf %78, %79 : vector<24x32xf32>
    %81 = vector.broadcast %0 : vector<24x1xf32> to vector<24x32xf32>
    %82 = arith.addf %76, %81 : vector<24x32xf32>
    %cst_51 = arith.constant 0.000000e+00 : f32
    %83 = vector.broadcast %cst_51 : f32 to vector<24x32xf32>
    %84 = arith.maximumf %82, %83 : vector<24x32xf32>
    %85 = vector.extract_strided_slice %80 {offsets = [0, 0], sizes = [24, 28], strides = [1, 1]} : vector<24x32xf32> to vector<24x28xf32>
    %86 = vector.extract_strided_slice %84 {offsets = [0, 0], sizes = [24, 28], strides = [1, 1]} : vector<24x32xf32> to vector<24x28xf32>
    %87 = vector.extract_strided_slice %80 {offsets = [0, 2], sizes = [24, 28], strides = [1, 1]} : vector<24x32xf32> to vector<24x28xf32>
    %88 = vector.extract_strided_slice %84 {offsets = [0, 2], sizes = [24, 28], strides = [1, 1]} : vector<24x32xf32> to vector<24x28xf32>
    %89 = vector.extract_strided_slice %80 {offsets = [0, 4], sizes = [24, 28], strides = [1, 1]} : vector<24x32xf32> to vector<24x28xf32>
    %90 = tpu.concatenate %85, %86, %87, %88, %89 in 0 : vector<24x28xf32>, vector<24x28xf32>, vector<24x28xf32>, vector<24x28xf32>, vector<24x28xf32> -> vector<120x28xf32>
    %c0_52 = arith.constant 0 : index
    %c0_53 = arith.constant 0 : index
    %91 = vector.load %arg5[%c0_52, %c0_53] : memref<24x1xf32, #tpu.memory_space<vmem>>, vector<24x1xf32>
    %c0_54 = arith.constant 0 : index
    %c0_55 = arith.constant 0 : index
    %92 = vector.load %arg4[%c0_54, %c0_55] : memref<24x120xf32, #tpu.memory_space<vmem>>, vector<24x120xf32>
    %cst_56 = arith.constant dense<0.000000e+00> : vector<24x28xf32>
    %93 = tpu.matmul %92, %90, %cst_56 {dimension_numbers = #tpu.dot_dimension_numbers<[1], [0], [0], [1], [0, 0, 1, 1], [], []>} : vector<24x120xf32>, vector<120x28xf32>, vector<24x28xf32> -> vector<24x28xf32>
    %94 = vector.broadcast %91 : vector<24x1xf32> to vector<24x28xf32>
    %95 = arith.addf %94, %93 : vector<24x28xf32>
    %cst_57 = arith.constant 0.000000e+00 : f32
    %96 = vector.broadcast %cst_57 : f32 to vector<24x28xf32>
    %97 = arith.maximumf %95, %96 : vector<24x28xf32>
    %98 = vector.extract_strided_slice %97 {offsets = [0, 0], sizes = [24, 12], strides = [1, 1]} : vector<24x28xf32> to vector<24x12xf32>
    %99 = vector.extract_strided_slice %97 {offsets = [0, 4], sizes = [24, 12], strides = [1, 1]} : vector<24x28xf32> to vector<24x12xf32>
    %100 = vector.extract_strided_slice %97 {offsets = [0, 8], sizes = [24, 12], strides = [1, 1]} : vector<24x28xf32> to vector<24x12xf32>
    %101 = vector.extract_strided_slice %97 {offsets = [0, 12], sizes = [24, 12], strides = [1, 1]} : vector<24x28xf32> to vector<24x12xf32>
    %102 = vector.extract_strided_slice %97 {offsets = [0, 16], sizes = [24, 12], strides = [1, 1]} : vector<24x28xf32> to vector<24x12xf32>
    %103 = tpu.concatenate %98, %99, %100, %101, %102 in 0 : vector<24x12xf32>, vector<24x12xf32>, vector<24x12xf32>, vector<24x12xf32>, vector<24x12xf32> -> vector<120x12xf32>
    %c0_58 = arith.constant 0 : index
    %c0_59 = arith.constant 0 : index
    %104 = vector.load %arg7[%c0_58, %c0_59] : memref<24x1xf32, #tpu.memory_space<vmem>>, vector<24x1xf32>
    %c0_60 = arith.constant 0 : index
    %c0_61 = arith.constant 0 : index
    %105 = vector.load %arg6[%c0_60, %c0_61] : memref<24x120xf32, #tpu.memory_space<vmem>>, vector<24x120xf32>
    %cst_62 = arith.constant dense<0.000000e+00> : vector<24x12xf32>
    %106 = tpu.matmul %105, %103, %cst_62 {dimension_numbers = #tpu.dot_dimension_numbers<[1], [0], [0], [1], [0, 0, 1, 1], [], []>} : vector<24x120xf32>, vector<120x12xf32>, vector<24x12xf32> -> vector<24x12xf32>
    %107 = vector.broadcast %104 : vector<24x1xf32> to vector<24x12xf32>
    %108 = arith.addf %107, %106 : vector<24x12xf32>
    %cst_63 = arith.constant 0.000000e+00 : f32
    %109 = vector.broadcast %cst_63 : f32 to vector<24x12xf32>
    %110 = arith.maximumf %108, %109 : vector<24x12xf32>
    %c0_64 = arith.constant 0 : index
    %c0_65 = arith.constant 0 : index
    %c0_66 = arith.constant 0 : index
    %111 = vector.load %arg8[%c0_64, %c0_65, %c0_66] : memref<1x24x12xf32, #tpu.memory_space<vmem>>, vector<1x24x12xf32>
    %112 = vector.shape_cast %111 : vector<1x24x12xf32> to vector<24x12xf32>
    %113 = vector.shape_cast %110 : vector<24x12xf32> to vector<1x24x12xf32>
    tpu.vector_store %arg8[%c0_64, %c0_65, %c0_66], %113 {strides = array<i32>} : memref<1x24x12xf32, #tpu.memory_space<vmem>>, vector<1x24x12xf32>,
    return
  }
  func.func @transform_0(%arg0: i32) -> (i32, i32, i32) {
    %c0_i32 = arith.constant 0 : i32
    %c0_i32_0 = arith.constant 0 : i32
    %c0_i32_1 = arith.constant 0 : i32
    return %arg0, %c0_i32, %c0_i32_0 : i32, i32, i32
  }
  func.func @transform_1(%arg0: i32) -> (i32, i32, i32) {
    %c0_i32 = arith.constant 0 : i32
    %c0_i32_0 = arith.constant 0 : i32
    %c0_i32_1 = arith.constant 0 : i32
    %c0_i32_2 = arith.constant 0 : i32
    return %c0_i32, %c0_i32_0, %c0_i32_1 : i32, i32, i32
  }
  func.func @transform_2(%arg0: i32) -> (i32, i32) {
    %c0_i32 = arith.constant 0 : i32
    %c0_i32_0 = arith.constant 0 : i32
    %c0_i32_1 = arith.constant 0 : i32
    return %c0_i32, %c0_i32_0 : i32, i32
  }
  func.func @transform_3(%arg0: i32) -> (i32, i32) {
    %c0_i32 = arith.constant 0 : i32
    %c0_i32_0 = arith.constant 0 : i32
    %c0_i32_1 = arith.constant 0 : i32
    return %c0_i32, %c0_i32_0 : i32, i32
  }
  func.func @transform_4(%arg0: i32) -> (i32, i32) {
    %c0_i32 = arith.constant 0 : i32
    %c0_i32_0 = arith.constant 0 : i32
    %c0_i32_1 = arith.constant 0 : i32
    return %c0_i32, %c0_i32_0 : i32, i32
  }
  func.func @transform_5(%arg0: i32) -> (i32, i32) {
    %c0_i32 = arith.constant 0 : i32
    %c0_i32_0 = arith.constant 0 : i32
    %c0_i32_1 = arith.constant 0 : i32
    return %c0_i32, %c0_i32_0 : i32, i32
  }
  func.func @transform_6(%arg0: i32) -> (i32, i32) {
    %c0_i32 = arith.constant 0 : i32
    %c0_i32_0 = arith.constant 0 : i32
    %c0_i32_1 = arith.constant 0 : i32
    return %c0_i32, %c0_i32_0 : i32, i32
  }
  func.func @transform_7(%arg0: i32) -> (i32, i32, i32) {
    %c0_i32 = arith.constant 0 : i32
    %c0_i32_0 = arith.constant 0 : i32
    %c0_i32_1 = arith.constant 0 : i32
    return %arg0, %c0_i32, %c0_i32_0 : i32, i32, i32
  }
}

</mosaic_0001>

<llo_original>
// kernel: tpu_custom_call.1
$region0: #{tpu_custom_call.1}
  #allocation0 [shape = 'u32[]', space=smem, size = 0x4, offset = 0x4, fixed_abs, tag = 'smem constant byte address 0x4 - core index']
  #allocation1 [shape = 'u32[144,128]{1,0:T(1,128)}', space=vmem, size = 0x12000, scoped, tag = 'internal scratch']
  %s0 = inlined_call_operand.vmem [shape: f32[1,8,34], index: 0, kind: input, shape index: {}]
  %s1 = inlined_call_operand.vmem [shape: f32[5,24,1], index: 1, kind: input, shape index: {}]
  %s2 = inlined_call_operand.vmem [shape: f32[24,1], index: 2, kind: input, shape index: {}]
  %s3 = inlined_call_operand.vmem [shape: f32[24,120], index: 3, kind: input, shape index: {}]
  %s4 = inlined_call_operand.vmem [shape: f32[24,1], index: 4, kind: input, shape index: {}]
  %s5 = inlined_call_operand.vmem [shape: f32[24,120], index: 5, kind: input, shape index: {}]
  %s6 = inlined_call_operand.vmem [shape: f32[24,1], index: 6, kind: input, shape index: {}]
  %s7 = inlined_call_operand.vmem [shape: f32[1,24,12], index: 7, kind: output, shape index: {}]
  %s8 = sld [smem:[#allocation0]]
  $region38: #{tpu_custom_call.1} parent=0
    _
  %s10 = ssub.s32 1, %s8
  %s11 = scalar_select 0, %s10, %s8
  // Predicated region
  $region2: #{tpu_custom_call.1} parent=0 // pred_check
    _
  $region3: #{tpu_custom_call.1} parent=0 // pred_check_branch
    %13 = sbr.rel (0) target = $region5
  $region4: #{tpu_custom_call.1} parent=0 // pred_region
    _
  $region5: #{tpu_custom_call.1} parent=0 // pred_fallthru
    _
  // Predicated region
  $region6: #{tpu_custom_call.1} parent=0 // pred_check
    _
  $region7: #{tpu_custom_call.1} parent=0 // pred_check_branch
    %15 = sbr.rel (0) target = $region9
  $region8: #{tpu_custom_call.1} parent=0 // pred_region
    _
  $region9: #{tpu_custom_call.1} parent=0 // pred_fallthru
    _
  // Predicated region
  $region10: #{tpu_custom_call.1} parent=0 // pred_check
    _
  $region11: #{tpu_custom_call.1} parent=0 // pred_check_branch
    %17 = sbr.rel (0) target = $region13
  $region12: #{tpu_custom_call.1} parent=0 // pred_region
    _
  $region13: #{tpu_custom_call.1} parent=0 // pred_fallthru
    _
  // Predicated region
  $region14: #{tpu_custom_call.1} parent=0 // pred_check
    _
  $region15: #{tpu_custom_call.1} parent=0 // pred_check_branch
    %19 = sbr.rel (0) target = $region17
  $region16: #{tpu_custom_call.1} parent=0 // pred_region
    _
  $region17: #{tpu_custom_call.1} parent=0 // pred_fallthru
    _
  // Predicated region
  $region18: #{tpu_custom_call.1} parent=0 // pred_check
    _
  $region19: #{tpu_custom_call.1} parent=0 // pred_check_branch
    %21 = sbr.rel (0) target = $region21
  $region20: #{tpu_custom_call.1} parent=0 // pred_region
    _
  $region21: #{tpu_custom_call.1} parent=0 // pred_fallthru
    _
  // Predicated region
  $region22: #{tpu_custom_call.1} parent=0 // pred_check
    _
  $region23: #{tpu_custom_call.1} parent=0 // pred_check_branch
    %23 = sbr.rel (0) target = $region25
  $region24: #{tpu_custom_call.1} parent=0 // pred_region
    _
  $region25: #{tpu_custom_call.1} parent=0 // pred_fallthru
    _
  // Predicated region
  $region26: #{tpu_custom_call.1} parent=0 // pred_check
    _
  $region27: #{tpu_custom_call.1} parent=0 // pred_check_branch
    %25 = sbr.rel (0) target = $region29
  $region28: #{tpu_custom_call.1} parent=0 // pred_region
    _
  $region29: #{tpu_custom_call.1} parent=0 // pred_fallthru
    _
  %v26 = vld [vmem:[%s2] sm:$0xff]
  %v27 = vld [vmem:[%s2 + $0x8] sm:$0xff]
  %v28 = vld [vmem:[%s2 + $0x10] sm:$0xff]
  %v29 = vld [vmem:[%s0] sm:$0x1]
  %v30 = vld [vmem:[%s0 + $0x1] sm:$0x1]
  %v31 = vld [vmem:[%s0 + $0x2] sm:$0x1]
  %v32 = vld [vmem:[%s0 + $0x3] sm:$0x1]
  %v33 = vld [vmem:[%s0 + $0x4] sm:$0x1]
  %v34 = vld [vmem:[%s0 + $0x5] sm:$0x1]
  %v35 = vld [vmem:[%s0 + $0x6] sm:$0x1]
  %v36 = vld [vmem:[%s0 + $0x7] sm:$0x1]
  %v37 = vld [vmem:[%s1] sm:$0xff]
  %v38 = vld [vmem:[%s1 + $0x8] sm:$0xff]
  %v39 = vld [vmem:[%s1 + $0x10] sm:$0xff]
  %41 = vset.pattern.permute.xlu0 0
  %42 = vperm.xlu0 %41, %v37
  %v43 = vpop.permute.xlu0 %42
  %46 = vset.pattern.permute.xlu0 0
  %47 = vperm.xlu0 %46, %v38
  %v48 = vpop.permute.xlu0 %47
  %51 = vset.pattern.permute.xlu0 0
  %52 = vperm.xlu0 %51, %v39
  %v53 = vpop.permute.xlu0 %52
  %v55 = vlaneseq
  %v56 = vshrl.u32 %v55, 7
  %v57 = vsub.s32 0, %v56
  %v58 = vrot.slane %v29, %v57
  %v59 = vmul.f32 %v43, %v58
  %v60 = vmul.f32 %v48, %v58
  %v61 = vmul.f32 %v53, %v58
  %s62 = scalar_lea.vmem %s1, 24
  %v63 = vld [vmem:[%s62] sm:$0xff]
  %v64 = vld [vmem:[%s62 + $0x8] sm:$0xff]
  %v65 = vld [vmem:[%s62 + $0x10] sm:$0xff]
  %67 = vset.pattern.permute.xlu0 0
  %68 = vperm.xlu0 %67, %v63
  %v69 = vpop.permute.xlu0 %68
  %72 = vset.pattern.permute.xlu0 0
  %73 = vperm.xlu0 %72, %v64
  %v74 = vpop.permute.xlu0 %73
  %77 = vset.pattern.permute.xlu0 0
  %78 = vperm.xlu0 %77, %v65
  %v79 = vpop.permute.xlu0 %78
  %v81 = vlaneseq
  %v82 = vshrl.u32 %v81, 7
  %v83 = vsub.s32 0, %v82
  %v84 = vrot.slane %v30, %v83
  %v85 = vmul.f32 %v69, %v84
  %v86 = vmul.f32 %v74, %v84
  %v87 = vmul.f32 %v79, %v84
  %v88 = vadd.f32 %v59, %v85
  %v89 = vadd.f32 %v60, %v86
  %v90 = vadd.f32 %v61, %v87
  %s91 = scalar_lea.vmem %s1, 48
  %v92 = vld [vmem:[%s91] sm:$0xff]
  %v93 = vld [vmem:[%s91 + $0x8] sm:$0xff]
  %v94 = vld [vmem:[%s91 + $0x10] sm:$0xff]
  %96 = vset.pattern.permute.xlu0 0
  %97 = vperm.xlu0 %96, %v92
  %v98 = vpop.permute.xlu0 %97
  %101 = vset.pattern.permute.xlu0 0
  %102 = vperm.xlu0 %101, %v93
  %v103 = vpop.permute.xlu0 %102
  %106 = vset.pattern.permute.xlu0 0
  %107 = vperm.xlu0 %106, %v94
  %v108 = vpop.permute.xlu0 %107
  %v110 = vlaneseq
  %v111 = vshrl.u32 %v110, 7
  %v112 = vsub.s32 0, %v111
  %v113 = vrot.slane %v31, %v112
  %v114 = vmul.f32 %v98, %v113
  %v115 = vmul.f32 %v103, %v113
  %v116 = vmul.f32 %v108, %v113
  %v117 = vadd.f32 %v88, %v114
  %v118 = vadd.f32 %v89, %v115
  %v119 = vadd.f32 %v90, %v116
  %s120 = scalar_lea.vmem %s1, 72
  %v121 = vld [vmem:[%s120] sm:$0xff]
  %v122 = vld [vmem:[%s120 + $0x8] sm:$0xff]
  %v123 = vld [vmem:[%s120 + $0x10] sm:$0xff]
  %125 = vset.pattern.permute.xlu0 0
  %126 = vperm.xlu0 %125, %v121
  %v127 = vpop.permute.xlu0 %126
  %130 = vset.pattern.permute.xlu0 0
  %131 = vperm.xlu0 %130, %v122
  %v132 = vpop.permute.xlu0 %131
  %135 = vset.pattern.permute.xlu0 0
  %136 = vperm.xlu0 %135, %v123
  %v137 = vpop.permute.xlu0 %136
  %v139 = vlaneseq
  %v140 = vshrl.u32 %v139, 7
  %v141 = vsub.s32 0, %v140
  %v142 = vrot.slane %v32, %v141
  %v143 = vmul.f32 %v127, %v142
  %v144 = vmul.f32 %v132, %v142
  %v145 = vmul.f32 %v137, %v142
  %v146 = vadd.f32 %v117, %v143
  %v147 = vadd.f32 %v118, %v144
  %v148 = vadd.f32 %v119, %v145
  %s149 = scalar_lea.vmem %s1, 96
  %v150 = vld [vmem:[%s149] sm:$0xff]
  %v151 = vld [vmem:[%s149 + $0x8] sm:$0xff]
  %v152 = vld [vmem:[%s149 + $0x10] sm:$0xff]
  %154 = vset.pattern.permute.xlu0 0
  %155 = vperm.xlu0 %154, %v150
  %v156 = vpop.permute.xlu0 %155
  %159 = vset.pattern.permute.xlu0 0
  %160 = vperm.xlu0 %159, %v151
  %v161 = vpop.permute.xlu0 %160
  %164 = vset.pattern.permute.xlu0 0
  %165 = vperm.xlu0 %164, %v152
  %v166 = vpop.permute.xlu0 %165
  %v168 = vlaneseq
  %v169 = vshrl.u32 %v168, 7
  %v170 = vsub.s32 0, %v169
  %v171 = vrot.slane %v33, %v170
  %v172 = vmul.f32 %v156, %v171
  %v173 = vmul.f32 %v161, %v171
  %v174 = vmul.f32 %v166, %v171
  %v175 = vadd.f32 %v146, %v172
  %v176 = vadd.f32 %v147, %v173
  %v177 = vadd.f32 %v148, %v174
  %v178 = vmul.f32 %v43, %v171
  %v179 = vmul.f32 %v48, %v171
  %v180 = vmul.f32 %v53, %v171
  %v181 = vlaneseq
  %v182 = vshrl.u32 %v181, 7
  %v183 = vsub.s32 0, %v182
  %v184 = vrot.slane %v34, %v183
  %v185 = vmul.f32 %v69, %v184
  %v186 = vmul.f32 %v74, %v184
  %v187 = vmul.f32 %v79, %v184
  %v188 = vadd.f32 %v178, %v185
  %v189 = vadd.f32 %v179, %v186
  %v190 = vadd.f32 %v180, %v187
  %v191 = vlaneseq
  %v192 = vshrl.u32 %v191, 7
  %v193 = vsub.s32 0, %v192
  %v194 = vrot.slane %v35, %v193
  %v195 = vmul.f32 %v98, %v194
  %v196 = vmul.f32 %v103, %v194
  %v197 = vmul.f32 %v108, %v194
  %v198 = vadd.f32 %v188, %v195
  %v199 = vadd.f32 %v189, %v196
  %v200 = vadd.f32 %v190, %v197
  %v201 = vlaneseq
  %v202 = vshrl.u32 %v201, 7
  %v203 = vsub.s32 0, %v202
  %v204 = vrot.slane %v36, %v203
  %v205 = vmul.f32 %v127, %v204
  %v206 = vmul.f32 %v132, %v204
  %v207 = vmul.f32 %v137, %v204
  %v208 = vadd.f32 %v198, %v205
  %v209 = vadd.f32 %v199, %v206
  %v210 = vadd.f32 %v200, %v207
  %v211 = vmul.f32 %v156, %v58
  %v212 = vmul.f32 %v161, %v58
  %v213 = vmul.f32 %v166, %v58
  %217 = vrot.lane.b32.xlu0 %v211, 126
  %v218 = vpop.permute.xlu0 %217
  %219 = vrot.lane.b32.xlu0 %v212, 126
  %v220 = vpop.permute.xlu0 %219
  %221 = vrot.lane.b32.xlu0 %v213, 126
  %v222 = vpop.permute.xlu0 %221
  %v226 = vadd.f32 %v208, %v218
  %v227 = vadd.f32 %v209, %v220
  %v228 = vadd.f32 %v210, %v222
  %230 = vset.pattern.permute.xlu0 0
  %231 = vperm.xlu0 %230, %v26
  %v232 = vpop.permute.xlu0 %231
  %235 = vset.pattern.permute.xlu0 0
  %236 = vperm.xlu0 %235, %v27
  %v237 = vpop.permute.xlu0 %236
  %240 = vset.pattern.permute.xlu0 0
  %241 = vperm.xlu0 %240, %v28
  %v242 = vpop.permute.xlu0 %241
  %v244 = vadd.f32 %v175, %v232
  %v245 = vadd.f32 %v176, %v237
  %v246 = vadd.f32 %v177, %v242
  %v247 = vmax.f32 %v244, 0.0
  %v248 = vmax.f32 %v245, 0.0
  %v249 = vmax.f32 %v246, 0.0
  %v250 = vadd.f32 %v226, %v232
  %v251 = vadd.f32 %v227, %v237
  %v252 = vadd.f32 %v228, %v242
  %v253 = vmax.f32 %v250, 0.0
  %v254 = vmax.f32 %v251, 0.0
  %v255 = vmax.f32 %v252, 0.0
  %259 = vrot.lane.b32.xlu0 %v247, 126
  %v260 = vpop.permute.xlu0 %259
  %261 = vrot.lane.b32.xlu0 %v248, 126
  %v262 = vpop.permute.xlu0 %261
  %263 = vrot.lane.b32.xlu0 %v249, 126
  %v264 = vpop.permute.xlu0 %263
  %271 = vrot.lane.b32.xlu0 %v253, 126
  %v272 = vpop.permute.xlu0 %271
  %273 = vrot.lane.b32.xlu0 %v254, 126
  %v274 = vpop.permute.xlu0 %273
  %275 = vrot.lane.b32.xlu0 %v255, 126
  %v276 = vpop.permute.xlu0 %275
  %280 = vrot.lane.b32.xlu0 %v247, 124
  %v281 = vpop.permute.xlu0 %280
  %282 = vrot.lane.b32.xlu0 %v248, 124
  %v283 = vpop.permute.xlu0 %282
  %284 = vrot.lane.b32.xlu0 %v249, 124
  %v285 = vpop.permute.xlu0 %284
  %v289 = vld [vmem:[%s4] sm:$0xff]
  %v290 = vld [vmem:[%s4 + $0x8] sm:$0xff]
  %v291 = vld [vmem:[%s4 + $0x10] sm:$0xff]
  %v292 = vld [vmem:[%s3] sm:$0xff]
  %v293 = vld [vmem:[%s3 + $0x8] sm:$0xff]
  %v294 = vld [vmem:[%s3 + $0x10] sm:$0xff]
  %vm295 = vcmask 982016
  %v297 = vsel %vm295, %v292, 0
  %v300 = vsel %vm295, %v293, 0
  %v303 = vsel %vm295, %v294, 0
  %305 = vmatprep.subr.mxu0 0.0
  %306 = vmatpush1.msra.mxu0 %v247
  %307 = vmatprep.subr.mxu0 0.0
  %308 = vmatpush1.msra.mxu0 %v248
  %309 = vmatprep.subr.mxu0 0.0
  %310 = vmatpush1.msra.mxu0 %v249
  %311 = vmatprep.subr.mxu0 0.0
  %312 = vmatpush1.msra.mxu0 %v253
  %313 = vmatprep.subr.mxu0 0.0
  %314 = vmatpush1.msra.mxu0 %v254
  %315 = vmatprep.subr.mxu0 0.0
  %316 = vmatpush1.msra.mxu0 %v255
  %317 = vmatprep.subr.mxu0 0.0
  %318 = vmatpush1.msra.mxu0 %v260
  %319 = vmatprep.subr.mxu0 0.0
  %320 = vmatpush1.msra.mxu0 %v262
  %321 = vmatprep.subr.mxu0 0.0
  %322 = vmatpush1.msra.mxu0 %v264
  %323 = vmatprep.subr.mxu0 0.0
  %324 = vmatpush1.msra.mxu0 %v272
  %325 = vmatprep.subr.mxu0 0.0
  %326 = vmatpush1.msra.mxu0 %v274
  %327 = vmatprep.subr.mxu0 0.0
  %328 = vmatpush1.msra.mxu0 %v276
  %329 = vmatprep.subr.mxu0 0.0
  %330 = vmatpush1.msra.mxu0 %v281
  %331 = vmatprep.subr.mxu0 0.0
  %332 = vmatpush1.msra.mxu0 %v283
  %333 = vmatprep.subr.mxu0 0.0
  %334 = vmatpush1.msra.mxu0 %v285
  %335 = vmatprep.subr.mxu0 0.0
  %336 = vmatpush1.msra.mxu0 0.0
  %337 = vmatprep.subr.mxu0 0.0
  %338 = vmatpush1.msra.mxu0 0.0
  %339 = vmatprep.subr.mxu0 0.0
  %340 = vmatpush1.msra.mxu0 0.0
  %341 = vmatprep.subr.mxu0 0.0
  %342 = vmatpush1.msra.mxu0 0.0
  %343 = vmatprep.subr.mxu0 0.0
  %344 = vmatpush1.msra.mxu0 0.0
  %345 = vmatprep.subr.mxu0 0.0
  %346 = vmatpush1.msra.mxu0 0.0
  %347 = vmatprep.subr.mxu0 0.0
  %348 = vmatpush1.msra.mxu0 0.0
  %349 = vmatprep.subr.mxu0 0.0
  %350 = vmatpush1.msra.mxu0 0.0
  %351 = vmatprep.subr.mxu0 0.0
  %352 = vmatpush1.msra.mxu0 0.0
  %353 = vmatprep.subr.mxu0 0.0
  %354 = vmatpush1.msra.mxu0 0.0
  %355 = vmatprep.subr.mxu0 0.0
  %356 = vmatpush1.msra.mxu0 0.0
  %357 = vmatprep.subr.mxu0 0.0
  %358 = vmatpush1.msra.mxu0 0.0
  %359 = vmatprep.subr.mxu0 0.0
  %360 = vmatpush1.msra.mxu0 0.0
  %361 = vmatprep.subr.mxu0 0.0
  %362 = vmatpush1.msra.mxu0 0.0
  %363 = vmatprep.subr.mxu0 0.0
  %364 = vmatpush1.msra.mxu0 0.0
  %365 = vmatprep.subr.mxu0 0.0
  %366 = vmatpush1.msra.mxu0 0.0
  %367 = vmatprep.subr.mxu0 0.0
  %368 = vmatpush1.msra.mxu0 0.0
  %369 = vmatprep.mubr.f32.mxu0 0.0
  %370 = vmatmul.mubr.f32.gmra.mrb[0].mxu0 %v297
  %v371 = vpop.f32.mrb[0].mxu0
  %v372 = vadd.f32 0.0, %v371
  %v373 = vpop.f32.mrb[0].mxu0
  %374 = vmatprep.mubr.f32.mxu0 0.0
  %375 = vmatmul.mubr.f32.gmra.mrb[0].mxu0 %v300
  %v376 = vpop.f32.mrb[0].mxu0
  %v377 = vadd.f32 0.0, %v376
  %v378 = vpop.f32.mrb[0].mxu0
  %379 = vmatprep.mubr.f32.mxu0 0.0
  %380 = vmatmul.mubr.f32.gmra.mrb[0].mxu0 %v303
  %v381 = vpop.f32.mrb[0].mxu0
  %v382 = vadd.f32 0.0, %v381
  %v383 = vpop.f32.mrb[0].mxu0
  %384 = vdwg.mxu0
  %386 = vset.pattern.permute.xlu0 0
  %387 = vperm.xlu0 %386, %v289
  %v388 = vpop.permute.xlu0 %387
  %391 = vset.pattern.permute.xlu0 0
  %392 = vperm.xlu0 %391, %v290
  %v393 = vpop.permute.xlu0 %392
  %396 = vset.pattern.permute.xlu0 0
  %397 = vperm.xlu0 %396, %v291
  %v398 = vpop.permute.xlu0 %397
  %v400 = vadd.f32 %v388, %v372
  %v401 = vadd.f32 %v393, %v377
  %v402 = vadd.f32 %v398, %v382
  %v403 = vmax.f32 %v400, 0.0
  %v404 = vmax.f32 %v401, 0.0
  %v405 = vmax.f32 %v402, 0.0
  %409 = vrot.lane.b32.xlu0 %v403, 124
  %v410 = vpop.permute.xlu0 %409
  %411 = vrot.lane.b32.xlu0 %v404, 124
  %v412 = vpop.permute.xlu0 %411
  %413 = vrot.lane.b32.xlu0 %v405, 124
  %v414 = vpop.permute.xlu0 %413
  %418 = vrot.lane.b32.xlu0 %v403, 120
  %v419 = vpop.permute.xlu0 %418
  %420 = vrot.lane.b32.xlu0 %v404, 120
  %v421 = vpop.permute.xlu0 %420
  %422 = vrot.lane.b32.xlu0 %v405, 120
  %v423 = vpop.permute.xlu0 %422
  %427 = vrot.lane.b32.xlu0 %v403, 116
  %v428 = vpop.permute.xlu0 %427
  %429 = vrot.lane.b32.xlu0 %v404, 116
  %v430 = vpop.permute.xlu0 %429
  %431 = vrot.lane.b32.xlu0 %v405, 116
  %v432 = vpop.permute.xlu0 %431
  %436 = vrot.lane.b32.xlu0 %v403, 112
  %v437 = vpop.permute.xlu0 %436
  %438 = vrot.lane.b32.xlu0 %v404, 112
  %v439 = vpop.permute.xlu0 %438
  %440 = vrot.lane.b32.xlu0 %v405, 112
  %v441 = vpop.permute.xlu0 %440
  %v445 = vld [vmem:[%s6] sm:$0xff]
  %v446 = vld [vmem:[%s6 + $0x8] sm:$0xff]
  %v447 = vld [vmem:[%s6 + $0x10] sm:$0xff]
  %v448 = vld [vmem:[%s5] sm:$0xff]
  %v449 = vld [vmem:[%s5 + $0x8] sm:$0xff]
  %v450 = vld [vmem:[%s5 + $0x10] sm:$0xff]
  %v452 = vsel %vm295, %v448, 0
  %v455 = vsel %vm295, %v449, 0
  %v458 = vsel %vm295, %v450, 0
  %460 = vmatprep.subr.mxu0 0.0
  %461 = vmatpush1.msra.mxu0 %v403
  %462 = vmatprep.subr.mxu0 0.0
  %463 = vmatpush1.msra.mxu0 %v404
  %464 = vmatprep.subr.mxu0 0.0
  %465 = vmatpush1.msra.mxu0 %v405
  %466 = vmatprep.subr.mxu0 0.0
  %467 = vmatpush1.msra.mxu0 %v410
  %468 = vmatprep.subr.mxu0 0.0
  %469 = vmatpush1.msra.mxu0 %v412
  %470 = vmatprep.subr.mxu0 0.0
  %471 = vmatpush1.msra.mxu0 %v414
  %472 = vmatprep.subr.mxu0 0.0
  %473 = vmatpush1.msra.mxu0 %v419
  %474 = vmatprep.subr.mxu0 0.0
  %475 = vmatpush1.msra.mxu0 %v421
  %476 = vmatprep.subr.mxu0 0.0
  %477 = vmatpush1.msra.mxu0 %v423
  %478 = vmatprep.subr.mxu0 0.0
  %479 = vmatpush1.msra.mxu0 %v428
  %480 = vmatprep.subr.mxu0 0.0
  %481 = vmatpush1.msra.mxu0 %v430
  %482 = vmatprep.subr.mxu0 0.0
  %483 = vmatpush1.msra.mxu0 %v432
  %484 = vmatprep.subr.mxu0 0.0
  %485 = vmatpush1.msra.mxu0 %v437
  %486 = vmatprep.subr.mxu0 0.0
  %487 = vmatpush1.msra.mxu0 %v439
  %488 = vmatprep.subr.mxu0 0.0
  %489 = vmatpush1.msra.mxu0 %v441
  %490 = vmatprep.subr.mxu0 0.0
  %491 = vmatpush1.msra.mxu0 0.0
  %492 = vmatprep.subr.mxu0 0.0
  %493 = vmatpush1.msra.mxu0 0.0
  %494 = vmatprep.subr.mxu0 0.0
  %495 = vmatpush1.msra.mxu0 0.0
  %496 = vmatprep.subr.mxu0 0.0
  %497 = vmatpush1.msra.mxu0 0.0
  %498 = vmatprep.subr.mxu0 0.0
  %499 = vmatpush1.msra.mxu0 0.0
  %500 = vmatprep.subr.mxu0 0.0
  %501 = vmatpush1.msra.mxu0 0.0
  %502 = vmatprep.subr.mxu0 0.0
  %503 = vmatpush1.msra.mxu0 0.0
  %504 = vmatprep.subr.mxu0 0.0
  %505 = vmatpush1.msra.mxu0 0.0
  %506 = vmatprep.subr.mxu0 0.0
  %507 = vmatpush1.msra.mxu0 0.0
  %508 = vmatprep.subr.mxu0 0.0
  %509 = vmatpush1.msra.mxu0 0.0
  %510 = vmatprep.subr.mxu0 0.0
  %511 = vmatpush1.msra.mxu0 0.0
  %512 = vmatprep.subr.mxu0 0.0
  %513 = vmatpush1.msra.mxu0 0.0
  %514 = vmatprep.subr.mxu0 0.0
  %515 = vmatpush1.msra.mxu0 0.0
  %516 = vmatprep.subr.mxu0 0.0
  %517 = vmatpush1.msra.mxu0 0.0
  %518 = vmatprep.subr.mxu0 0.0
  %519 = vmatpush1.msra.mxu0 0.0
  %520 = vmatprep.subr.mxu0 0.0
  %521 = vmatpush1.msra.mxu0 0.0
  %522 = vmatprep.subr.mxu0 0.0
  %523 = vmatpush1.msra.mxu0 0.0
  %524 = vmatprep.mubr.f32.mxu0 0.0
  %525 = vmatmul.mubr.f32.gmra.mrb[0].mxu0 %v452
  %v526 = vpop.f32.mrb[0].mxu0
  %v527 = vadd.f32 0.0, %v526
  %v528 = vpop.f32.mrb[0].mxu0
  %529 = vmatprep.mubr.f32.mxu0 0.0
  %530 = vmatmul.mubr.f32.gmra.mrb[0].mxu0 %v455
  %v531 = vpop.f32.mrb[0].mxu0
  %v532 = vadd.f32 0.0, %v531
  %v533 = vpop.f32.mrb[0].mxu0
  %534 = vmatprep.mubr.f32.mxu0 0.0
  %535 = vmatmul.mubr.f32.gmra.mrb[0].mxu0 %v458
  %v536 = vpop.f32.mrb[0].mxu0
  %v537 = vadd.f32 0.0, %v536
  %v538 = vpop.f32.mrb[0].mxu0
  %539 = vdwg.mxu0
  %541 = vset.pattern.permute.xlu0 0
  %542 = vperm.xlu0 %541, %v445
  %v543 = vpop.permute.xlu0 %542
  %546 = vset.pattern.permute.xlu0 0
  %547 = vperm.xlu0 %546, %v446
  %v548 = vpop.permute.xlu0 %547
  %551 = vset.pattern.permute.xlu0 0
  %552 = vperm.xlu0 %551, %v447
  %v553 = vpop.permute.xlu0 %552
  %v555 = vadd.f32 %v543, %v527
  %v556 = vadd.f32 %v548, %v532
  %v557 = vadd.f32 %v553, %v537
  %v558 = vmax.f32 %v555, 0.0
  %v559 = vmax.f32 %v556, 0.0
  %v560 = vmax.f32 %v557, 0.0
  %vm561 = vcmask 97280
  %562 = vst.msk [vmem:[%s7] sm:$0xff] %vm561, %v558
  %563 = vst.msk [vmem:[%s7 + $0x8] sm:$0xff] %vm561, %v559
  %564 = vst.msk [vmem:[%s7 + $0x10] sm:$0xff] %vm561, %v560
  // Predicated region
  $region30: #{tpu_custom_call.1} parent=0 // pred_check
    _
  $region31: #{tpu_custom_call.1} parent=0 // pred_check_branch
    %566 = sbr.rel (0) target = $region33
  $region32: #{tpu_custom_call.1} parent=0 // pred_region
    _
  $region33: #{tpu_custom_call.1} parent=0 // pred_fallthru
    _
  // Predicated region
  $region34: #{tpu_custom_call.1} parent=0 // pred_check
    _
  $region35: #{tpu_custom_call.1} parent=0 // pred_check_branch
    %568 = sbr.rel (0) target = $region37
  $region36: #{tpu_custom_call.1} parent=0 // pred_region
    _
  $region37: #{tpu_custom_call.1} parent=0 // pred_fallthru
    _

</llo_original>
